<compile_context>
chip_gen: v6e
topology: v6e:2x2x1
jax: 0.10.0
libtpu: 0.0.40
codegen_flags: <defaults>
</compile_context>

<pallas_src>
import jax
import jax.numpy as jnp
from jax.experimental import pallas as pl
from jax.experimental.pallas import tpu as pltpu


def lr_kernel(x_ref, w_ref, b_ref, o_ref):
    # x_ref: (TILE_B, F) VMEM   w_ref: (1, F) VMEM
    # b_ref: (1,)        SMEM   o_ref: (TILE_B, 1) VMEM
    x = x_ref[...].astype(jnp.float32)
    w = w_ref[...].astype(jnp.float32)
    b = b_ref[0].astype(jnp.float32)                  # scalar read from SMEM
    # VPU multiply + XLU lane reduction: avoids the w.T relayout and the
    # width-1 MXU matmul entirely.
    z = jnp.sum(x * w, axis=-1, keepdims=True) + b    # (TILE_B, 1) f32
    # exp lands on the EUP; the divide touches only a tiny (TILE_B, 1) slab.
    o_ref[...] = (1.0 / (1.0 + jnp.exp(-z))).astype(o_ref.dtype)


def _pick_tile_b(batch, n_features, itemsize=4,
                 vmem_budget_bytes=8 * 1024 * 1024):
    """Largest batch tile that (a) keeps the double-buffered x slab within a
    conservative VMEM budget (safe for v5e/v6e/v7x scoped defaults), (b) is a
    multiple of 8 (sublane constraint), and (c) divides `batch` evenly so no
    masked remainder tile is needed.  Falls back to the full batch extent,
    which is always a legal block shape."""
    if batch <= 8 or batch % 8 != 0:
        return batch
    max_rows = vmem_budget_bytes // (2 * n_features * itemsize)
    tile = min(batch, max(8, (max_rows // 8) * 8), 2048)
    while tile > 8 and batch % tile != 0:
        tile -= 8
    return tile if batch % tile == 0 else batch


def lr_forward(x, w, b, *, tile_b=None):
    """x: (B, F), w: (1, F), b: (1,)  ->  sigmoid(x @ w.T + b) : (B, 1) f32."""
    B, F = x.shape
    if tile_b is None:
        tile_b = _pick_tile_b(B, F, jnp.dtype(x.dtype).itemsize)
    grid = (pl.cdiv(B, tile_b),)
    # TODO(synk): for very wide F (feature slab no longer fits VMEM), add a
    # feature-chunk reduction grid axis (last, "arbitrary") with a VMEM f32
    # accumulator and pl.when init/finalize.
    return pl.pallas_call(
        lr_kernel,
        out_shape=jax.ShapeDtypeStruct((B, 1), jnp.float32),
        grid_spec=pltpu.PrefetchScalarGridSpec(
            num_scalar_prefetch=0,
            grid=grid,
            in_specs=[
                # x: tiled along batch, pipelined (double-buffered) by Pallas.
                pl.BlockSpec((tile_b, F), lambda i: (i, 0)),
                # weight: pinned; stays VMEM-resident across the whole grid.
                pl.BlockSpec((1, F), lambda i: (0, 0)),
                # bias: whole (1,) array in SMEM, read as a scalar.
                pl.BlockSpec(memory_space=pltpu.MemorySpace.SMEM),
            ],
            out_specs=pl.BlockSpec((tile_b, 1), lambda i: (i, 0)),
        ),
        compiler_params=pltpu.CompilerParams(
            dimension_semantics=("parallel",),
        ),
    )(x, w, b)


if __name__ == "__main__":
    key = jax.random.PRNGKey(0)
    kx, kw, kb = jax.random.split(key, 3)

    batch = 64
    n_features = 32

    # Deterministic parameter init (mimics torch.nn.Linear's uniform range).
    bound = 1.0 / (n_features ** 0.5)
    w = jax.random.uniform(kw, (1, n_features), jnp.float32, -bound, bound)
    b = jax.random.uniform(kb, (1,), jnp.float32, -bound, bound)
    x = jax.random.normal(kx, (batch, n_features), jnp.float32)

    # Small explicit tile so the pipelined grid actually has multiple steps
    # (grid=(4,)); production callers can rely on the auto tile picker.
    out = lr_forward(x, w, b, tile_b=16)
    out = jax.block_until_ready(out)

    # Reference check against plain JAX.
    ref = jax.nn.sigmoid(x @ w.T + b)
    assert out.shape == (batch, 1)
    assert jnp.allclose(out, ref, atol=1e-5, rtol=1e-5)

    print("KERNEL_OK")
</pallas_src>

<mosaic_0001>
module attributes {stable_mosaic.version = 11 : i64} {
  func.func @lr_kernel(%arg0: i32, %arg1: memref<16x32xf32, #tpu.memory_space<vmem>>, %arg2: memref<1x32xf32, #tpu.memory_space<vmem>>, %arg3: memref<1xf32, #tpu.memory_space<smem>>, %arg4: memref<16x1xf32, #tpu.memory_space<vmem>>) attributes {dimension_semantics = [#tpu.dimension_semantics<parallel>], iteration_bounds = array<i64: 4>, scalar_prefetch = 0 : i64, scratch_operands = 0 : i64, tpu.core_type = #tpu.core_type<tc>, window_params = [{transform_indices = @transform_0, window_bounds = array<i64: 16, 32>}, {pipeline_mode = #tpu.pipeline_mode<synchronous>, transform_indices = @transform_1, window_bounds = array<i64: 1, 32>}, {transform_indices = @transform_2, window_bounds = array<i64: 1>}, {transform_indices = @transform_3, window_bounds = array<i64: 16, 1>}]} {
    %c0 = arith.constant 0 : index
    %c0_0 = arith.constant 0 : index
    %0 = vector.load %arg1[%c0, %c0_0] : memref<16x32xf32, #tpu.memory_space<vmem>>, vector<16x32xf32>
    %c0_1 = arith.constant 0 : index
    %c0_2 = arith.constant 0 : index
    %1 = vector.load %arg2[%c0_1, %c0_2] : memref<1x32xf32, #tpu.memory_space<vmem>>, vector<1x32xf32>
    %c0_3 = arith.constant 0 : index
    %2 = memref.load %arg3[%c0_3] : memref<1xf32, #tpu.memory_space<smem>>
    %3 = vector.broadcast %1 : vector<1x32xf32> to vector<16x32xf32>
    %4 = arith.mulf %0, %3 : vector<16x32xf32>
    %cst = arith.constant dense<0.000000e+00> : vector<16xf32>
    %5 = vector.multi_reduction <add>, %4, %cst [1] : vector<16x32xf32> to vector<16xf32>
    %6 = vector.shape_cast %5 : vector<16xf32> to vector<16x1xf32>
    %7 = vector.broadcast %2 : f32 to vector<16x1xf32>
    %8 = arith.addf %6, %7 : vector<16x1xf32>
    %cst_4 = arith.constant 0.000000e+00 : f32
    %9 = vector.broadcast %cst_4 : f32 to vector<16x1xf32>
    %10 = arith.subf %9, %8 : vector<16x1xf32>
    %11 = math.exp %10 : vector<16x1xf32>
    %cst_5 = arith.constant 1.000000e+00 : f32
    %12 = vector.broadcast %cst_5 : f32 to vector<16x1xf32>
    %13 = arith.addf %12, %11 : vector<16x1xf32>
    %cst_6 = arith.constant 1.000000e+00 : f32
    %14 = vector.broadcast %cst_6 : f32 to vector<16x1xf32>
    %15 = arith.divf %14, %13 : vector<16x1xf32>
    %c0_7 = arith.constant 0 : index
    %c0_8 = arith.constant 0 : index
    %16 = vector.load %arg4[%c0_7, %c0_8] : memref<16x1xf32, #tpu.memory_space<vmem>>, vector<16x1xf32>
    tpu.vector_store %arg4[%c0_7, %c0_8], %15 {strides = array<i32>} : memref<16x1xf32, #tpu.memory_space<vmem>>, vector<16x1xf32>,
    return
  }
  func.func @transform_0(%arg0: i32) -> (i32, i32) {
    %c0_i32 = arith.constant 0 : i32
    %c0_i32_0 = arith.constant 0 : i32
    return %arg0, %c0_i32 : i32, i32
  }
  func.func @transform_1(%arg0: i32) -> (i32, i32) {
    %c0_i32 = arith.constant 0 : i32
    %c0_i32_0 = arith.constant 0 : i32
    %c0_i32_1 = arith.constant 0 : i32
    return %c0_i32, %c0_i32_0 : i32, i32
  }
  func.func @transform_2(%arg0: i32) -> i32 {
    %c0_i32 = arith.constant 0 : i32
    %c0_i32_0 = arith.constant 0 : i32
    return %c0_i32 : i32
  }
  func.func @transform_3(%arg0: i32) -> (i32, i32) {
    %c0_i32 = arith.constant 0 : i32
    %c0_i32_0 = arith.constant 0 : i32
    return %arg0, %c0_i32 : i32, i32
  }
}

</mosaic_0001>

<llo_original>
// kernel: tpu_custom_call.1
$region0: #{tpu_custom_call.1}
  #allocation0 [shape = 'u32[]', space=smem, size = 0x4, offset = 0x4, fixed_abs, tag = 'smem constant byte address 0x4 - core index']
  #allocation1 [shape = 'u32[144,128]{1,0:T(1,128)}', space=vmem, size = 0x12000, scoped, tag = 'internal scratch']
  #allocation2 [shape = 'f32[1]{0:T(128)S(6)}', space=smem, size = 0x200, scoped, tag = 'scoped memory for tpu_custom_call.1']
  %s0 = inlined_call_operand.vmem [shape: f32[64,32], index: 0, kind: input, shape index: {}]
  %s1 = inlined_call_operand.vmem [shape: f32[1,32], index: 1, kind: input, shape index: {}]
  %s2 = inlined_call_operand.<no memory space> [shape: f32[1], index: 2, kind: input, shape index: {}]
  %s3 = inlined_call_operand.vmem [shape: f32[64,1], index: 3, kind: output, shape index: {}]
  %s4 = sld [smem:[#allocation0]]
  $region45: #{tpu_custom_call.1} parent=0
    _
  %s6 = ssub.s32 1, %s4
  %s7 = scalar_select 0, %s6, %s4
  %8 = sst [smem:[#allocation2]] %s2
  loop: start=0, step=1, limit=6
  $region2: #{tpu_custom_call.1} parent=0 // loop_pre_header
    _
  $region3: #{tpu_custom_call.1} parent=0 // loop_header
    %s10 = sphi 0, %s14
    %p11 = scmp.ge.s32.totalorder %s10, 6
    %s20 = sphi 0, %s22
    %s23 = sphi 0, %s20
    %s24 = sphi 0, %s23
    %s40 = sphi 0, %s24
    %s44 = sphi 0, %s44
    %s46 = sphi 0, %s44
    %s47 = sphi 0, %s46
    %s61 = sphi 0, %s47
    %s65 = sphi 0, %s65
    %s67 = sphi 0, %s65
    %s68 = sphi 0, %s67
    %s82 = sphi 0, %s68
    %s88 = sphi 0, %s90
    %s91 = sphi 0, %s88
    %s92 = sphi 0, %s91
    %s108 = sphi 0, %s92
  $region4: #{tpu_custom_call.1} parent=0 // loop_header_branch
    %13 = sbr.rel (%p11) target = $region8
  $region5: #{tpu_custom_call.1} parent=0 // loop_body
    %s15 = ssub.s32 %s10, 1
    %s16 = ssub.s32 %s10, 2
    %s17 = sadd.s32 %s10, 1
    %s18 = ssub.s32 %s10, %s17
    %p19 = scmp.eq.s32.totalorder %s18, 0
    %s21 = sadd.s32 %s20, 1
    %s22 = scalar_select %p19, %s20, %s21
    %p25 = pneg %p19
    %p26 = scmp.eq.s32.totalorder %s10, 3
    %p27 = por %p25, %p26
    %p28 = scmp.ne.s32.totalorder %s20, %s23
    %p29 = scmp.eq.s32.totalorder %s10, 0
    %p30 = por %p28, %p29
    %p31 = scmp.ne.s32.totalorder %s20, %s23
    %p32 = scmp.eq.s32.totalorder %s15, 3
    %p33 = por %p31, %p32
    %p34 = scmp.ne.s32.totalorder %s23, %s24
    %p35 = scmp.eq.s32.totalorder %s15, 0
    %p36 = por %p34, %p35
    %p37 = scmp.ne.s32.totalorder %s23, %s24
    %p38 = scmp.eq.s32.totalorder %s16, 3
    %p39 = por %p37, %p38
    %p41 = scmp.ne.s32.totalorder %s24, %s40
    %p42 = scmp.eq.s32.totalorder %s16, 0
    %p43 = por %p41, %p42
    %s45 = sadd.s32 %s44, 1
    %p48 = scmp.eq.s32.totalorder %s10, 3
    %p49 = scmp.ne.s32.totalorder %s44, %s46
    %p50 = scmp.eq.s32.totalorder %s10, 0
    %p51 = por %p49, %p50
    %p52 = scmp.ne.s32.totalorder %s44, %s46
    %p53 = scmp.eq.s32.totalorder %s15, 3
    %p54 = por %p52, %p53
    %p55 = scmp.ne.s32.totalorder %s46, %s47
    %p56 = scmp.eq.s32.totalorder %s15, 0
    %p57 = por %p55, %p56
    %p58 = scmp.ne.s32.totalorder %s46, %s47
    %p59 = scmp.eq.s32.totalorder %s16, 3
    %p60 = por %p58, %p59
    %p62 = scmp.ne.s32.totalorder %s47, %s61
    %p63 = scmp.eq.s32.totalorder %s16, 0
    %p64 = por %p62, %p63
    %s66 = sadd.s32 %s65, 1
    %p69 = scmp.eq.s32.totalorder %s10, 3
    %p70 = scmp.ne.s32.totalorder %s65, %s67
    %p71 = scmp.eq.s32.totalorder %s10, 0
    %p72 = por %p70, %p71
    %p73 = scmp.ne.s32.totalorder %s65, %s67
    %p74 = scmp.eq.s32.totalorder %s15, 3
    %p75 = por %p73, %p74
    %p76 = scmp.ne.s32.totalorder %s67, %s68
    %p77 = scmp.eq.s32.totalorder %s15, 0
    %p78 = por %p76, %p77
    %p79 = scmp.ne.s32.totalorder %s67, %s68
    %p80 = scmp.eq.s32.totalorder %s16, 3
    %p81 = por %p79, %p80
    %p83 = scmp.ne.s32.totalorder %s68, %s82
    %p84 = scmp.eq.s32.totalorder %s16, 0
    %p85 = por %p83, %p84
    %s86 = ssub.s32 %s10, %s17
    %p87 = scmp.eq.s32.totalorder %s86, 0
    %s89 = sadd.s32 %s88, 1
    %s90 = scalar_select %p87, %s88, %s89
    %p93 = pneg %p87
    %p94 = scmp.eq.s32.totalorder %s10, 3
    %p95 = por %p93, %p94
    %p96 = scmp.ne.s32.totalorder %s88, %s91
    %p97 = scmp.eq.s32.totalorder %s10, 0
    %p98 = por %p96, %p97
    %p99 = scmp.ne.s32.totalorder %s88, %s91
    %p100 = scmp.eq.s32.totalorder %s15, 3
    %p101 = por %p99, %p100
    %p102 = scmp.ne.s32.totalorder %s91, %s92
    %p103 = scmp.eq.s32.totalorder %s15, 0
    %p104 = por %p102, %p103
    %p105 = scmp.ne.s32.totalorder %s91, %s92
    %p106 = scmp.eq.s32.totalorder %s16, 3
    %p107 = por %p105, %p106
    %p109 = scmp.ne.s32.totalorder %s92, %s108
    %p110 = scmp.eq.s32.totalorder %s16, 0
    %p111 = por %p109, %p110
    %p112 = scmp.le.s32.totalorder 1, %s10
    %p113 = scmp.lt.s32.totalorder %s10, 5
    %p114 = pnand %p112, %p113
    %p115 = pneg %p114
    // Predicated region
    $region9: #{tpu_custom_call.1} parent=5 // pred_check
      _
    $region10: #{tpu_custom_call.1} parent=5 // pred_check_branch
      %117 = sbr.rel (%p114) target = $region12
    $region11: #{tpu_custom_call.1} parent=5 // pred_region
      %s118 = ssub.s32 %s10, 1
      // Predicated region
      $region13: #{tpu_custom_call.1} parent=11 // pred_check
        %p119 = pneg %p57
      $region14: #{tpu_custom_call.1} parent=11 // pred_check_branch
        %121 = sbr.rel (%p119) target = $region16
      $region15: #{tpu_custom_call.1} parent=11 // pred_region
        _
      $region16: #{tpu_custom_call.1} parent=11 // pred_fallthru
        _
      // Predicated region
      $region17: #{tpu_custom_call.1} parent=11 // pred_check
        %p122 = pneg %p78
      $region18: #{tpu_custom_call.1} parent=11 // pred_check_branch
        %124 = sbr.rel (%p122) target = $region20
      $region19: #{tpu_custom_call.1} parent=11 // pred_region
        _
      $region20: #{tpu_custom_call.1} parent=11 // pred_fallthru
        _
    $region12: #{tpu_custom_call.1} parent=5 // pred_fallthru
      _
    %p125 = scmp.lt.s32.totalorder %s10, 4
    // Predicated region
    $region21: #{tpu_custom_call.1} parent=5 // pred_check
      %p126 = pneg %p125
    $region22: #{tpu_custom_call.1} parent=5 // pred_check_branch
      %128 = sbr.rel (%p126) target = $region24
    $region23: #{tpu_custom_call.1} parent=5 // pred_region
      // Predicated region
      $region25: #{tpu_custom_call.1} parent=23 // pred_check
        %p129 = pneg %p30
      $region26: #{tpu_custom_call.1} parent=23 // pred_check_branch
        %131 = sbr.rel (%p129) target = $region28
      $region27: #{tpu_custom_call.1} parent=23 // pred_region
        %s132 = smul.u32 2, %s10
        %p133 = scmp.lt.s32.totalorder %s132, 7
        %s134 = scalar_select %p133, %s132, 7
        %s135 = smul.addr %s134, 8
        %s136 = scalar_lea.vmem %s0, %s135
        %s137 = smul.u32 2, %s10
      $region28: #{tpu_custom_call.1} parent=23 // pred_fallthru
        _
    $region24: #{tpu_custom_call.1} parent=5 // pred_fallthru
      _
    %p138 = scmp.le.s32.totalorder 1, %s10
    %p139 = scmp.lt.s32.totalorder %s10, 5
    %p140 = pnand %p138, %p139
    %p141 = pneg %p140
    // Predicated region
    $region29: #{tpu_custom_call.1} parent=5 // pred_check
      _
    $region30: #{tpu_custom_call.1} parent=5 // pred_check_branch
      %143 = sbr.rel (%p140) target = $region32
    $region31: #{tpu_custom_call.1} parent=5 // pred_region
      %s144 = ssub.s32 %s10, 1
      %s145 = smul.u32 2, %s15
      %p146 = scmp.lt.s32.totalorder %s145, 7
      %s147 = scalar_select %p146, %s145, 7
      %s148 = smul.addr %s147, 8
      %s149 = scalar_lea.vmem %s0, %s148
      %p150 = pneg %p36
      %p151 = pneg %p33
      %p152 = pneg %p57
      %p153 = pneg %p54
      %p154 = pneg %p78
      %p155 = pneg %p75
      %p156 = pneg %p104
      %p157 = pneg %p101
      %s158 = smul.u32 2, %s15
      %p159 = scmp.lt.s32.totalorder %s158, 7
      %s160 = scalar_select %p159, %s158, 7
      %s161 = smul.addr %s160, 8
      %s162 = scalar_lea.vmem %s3, %s161
      %s163 = smul.u32 2, %s15
      %p164 = scmp.lt.s32.totalorder %s163, 7
      %s165 = scalar_select %p164, %s163, 7
      %s166 = smul.addr %s165, 8
      %s167 = scalar_lea.vmem %s0, %s166
      %s168 = smul.u32 2, %s15
      %s169 = smul.u32 2, %s15
      %p170 = scmp.lt.s32.totalorder %s169, 7
      %s171 = scalar_select %p170, %s169, 7
      %s172 = smul.addr %s171, 8
      %s173 = scalar_lea.vmem %s3, %s172
      %s174 = smul.u32 2, %s15
      %v175 = vld [vmem:[%s167] sm:$0xff]
      %v176 = vld [vmem:[%s167 + $0x8] sm:$0xff]
      %v177 = vld [vmem:[%s1] sm:$0x1]
      %s178 = sld [smem:[#allocation2]]
      %v180 = vlaneseq
      %v181 = vshrl.u32 %v180, 7
      %v182 = vsub.s32 0, %v181
      %v183 = vrot.slane %v177, %v182
      %v185 = vmul.f32 %v175, %v183
      %v186 = vmul.f32 %v176, %v183
      %vm187 = vcmask 261120
      %v188 = vsel %vm187, %v185, 0.0
      %189 = vadd.xlane.f32.xlu0 %v188
      %v190 = vpop.xlane.xlu0 %189
      %v191 = vsel %vm187, %v186, 0.0
      %192 = vadd.xlane.f32.xlu0 %v191
      %v193 = vpop.xlane.xlu0 %192
      %v194 = vstv %s178
      %v195 = vadd.f32 %v190, %v194
      %v196 = vadd.f32 %v193, %v194
      %v197 = vsub.f32 0.0, %v195
      %v198 = vsub.f32 0.0, %v196
      %v199 = vmul.f32 %v197, 1.442695
      %v200 = vpow.pop %v199
      %v201 = vmul.f32 %v198, 1.442695
      %v202 = vpow.pop %v201
      %v203 = vadd.f32 %v200, 1.0
      %v204 = vadd.f32 %v202, 1.0
      %v205 = vrcp.pop %v203
      %v206 = vmul.f32 1.0, %v205
      %v207 = vrcp.pop %v204
      %v208 = vmul.f32 1.0, %v207
      %vm209 = vcmask 7168
      %210 = vst.msk [vmem:[%s173] sm:$0xff] %vm209, %v206
      %211 = vst.msk [vmem:[%s173 + $0x8] sm:$0xff] %vm209, %v208
      %s212 = smul.u32 2, %s15
      %p213 = scmp.lt.s32.totalorder %s212, 7
      %s214 = scalar_select %p213, %s212, 7
      %s215 = smul.addr %s214, 8
      %s216 = scalar_lea.vmem %s3, %s215
      // Predicated region
      $region33: #{tpu_custom_call.1} parent=31 // pred_check
        %p217 = pneg %p101
      $region34: #{tpu_custom_call.1} parent=31 // pred_check_branch
        %219 = sbr.rel (%p217) target = $region36
      $region35: #{tpu_custom_call.1} parent=31 // pred_region
        %s220 = smul.u32 2, %s15
      $region36: #{tpu_custom_call.1} parent=31 // pred_fallthru
        _
    $region32: #{tpu_custom_call.1} parent=5 // pred_fallthru
      _
    %p221 = scmp.le.s32.totalorder 2, %s10
    // Predicated region
    $region37: #{tpu_custom_call.1} parent=5 // pred_check
      %p222 = pneg %p221
    $region38: #{tpu_custom_call.1} parent=5 // pred_check_branch
      %224 = sbr.rel (%p222) target = $region40
    $region39: #{tpu_custom_call.1} parent=5 // pred_region
      %s225 = ssub.s32 %s10, 2
      // Predicated region
      $region41: #{tpu_custom_call.1} parent=39 // pred_check
        %p226 = pneg %p107
      $region42: #{tpu_custom_call.1} parent=39 // pred_check_branch
        %228 = sbr.rel (%p226) target = $region44
      $region43: #{tpu_custom_call.1} parent=39 // pred_region
        %s229 = smul.u32 2, %s16
        %p230 = scmp.lt.s32.totalorder %s229, 7
        %s231 = scalar_select %p230, %s229, 7
        %s232 = smul.addr %s231, 8
        %s233 = scalar_lea.vmem %s3, %s232
      $region44: #{tpu_custom_call.1} parent=39 // pred_fallthru
        _
    $region40: #{tpu_custom_call.1} parent=5 // pred_fallthru
      _
  $region6: #{tpu_custom_call.1} parent=0 // loop_footer
    %s14 = sadd.s32 1, %s10
  $region7: #{tpu_custom_call.1} parent=0 // loop_footer_branch
    %9 = sbr.rel target = $region3
  $region8: #{tpu_custom_call.1} parent=0 // loop_exit
    _

</llo_original>
